<compile_context>
chip_gen: v7x
topology: tpu7x:2x2x1
jax: 0.10.0
libtpu: 0.0.40
codegen_flags: <defaults>
</compile_context>

<pallas_src>
import functools

import jax
import jax.numpy as jnp
import numpy as np
from jax.experimental import pallas as pl
from jax.experimental.pallas import tpu as pltpu


# ---------------------------------------------------------------------------
# Host-side bilinear weight matrices (cached per size pair).
# ---------------------------------------------------------------------------
@functools.lru_cache(maxsize=64)
def _bilinear_matrix(out_size: int, in_size: int) -> np.ndarray:
    """(out_size, in_size) bilinear weights, align_corners=False convention."""
    scale = in_size / out_size
    dst = np.arange(out_size, dtype=np.float64)
    src = np.clip((dst + 0.5) * scale - 0.5, 0.0, in_size - 1)
    lo = np.floor(src).astype(np.int64)
    hi = np.minimum(lo + 1, in_size - 1)
    w_hi = (src - lo).astype(np.float32)
    w_lo = np.float32(1.0) - w_hi
    m = np.zeros((out_size, in_size), dtype=np.float32)
    rows = np.arange(out_size)
    m[rows, lo] += w_lo
    m[rows, hi] += w_hi          # lo == hi at the border -> weights sum to 1
    return m


@functools.lru_cache(maxsize=64)
def _bilinear_matrices_device(orig_h, orig_w, new_h, new_w):
    wy = jnp.asarray(_bilinear_matrix(new_h, orig_h), dtype=jnp.bfloat16)     # (new_h, H)
    wxt = jnp.asarray(_bilinear_matrix(new_w, orig_w).T, dtype=jnp.bfloat16)  # (W, new_w)
    return wy, wxt


# ---------------------------------------------------------------------------
# Kernel: grid = (channel, output-row tile).
# ---------------------------------------------------------------------------
def _resize_kernel(img_ref, wxt_ref, wy_ref, out_ref, rows_ref):
    r = pl.program_id(1)

    # W-axis pass, once per channel (rows_ref persists across the row-tile axis).
    @pl.when(r == 0)
    def _():
        src = img_ref[0].astype(jnp.bfloat16)                         # (H, W)
        rows_ref[...] = jnp.dot(
            src, wxt_ref[...], preferred_element_type=jnp.float32     # (H, new_W)
        ).astype(jnp.bfloat16)

    # H-axis pass for this output-row band.
    out_ref[0] = jnp.dot(
        wy_ref[...], rows_ref[...], preferred_element_type=jnp.float32  # (TR, new_W)
    ).astype(out_ref.dtype)


def _resize_pallas(image, new_h, new_w, out_dtype, row_tile=256):
    c, h, w = image.shape
    wy, wxt = _bilinear_matrices_device(h, w, new_h, new_w)

    tr = new_h if new_h <= row_tile else row_tile        # multiple of 8 or full
    grid = (c, pl.cdiv(new_h, tr))

    # VMEM budget from actual buffers (double-buffered inputs/outputs + scratch).
    img_isz = np.dtype(image.dtype).itemsize
    out_isz = np.dtype(out_dtype).itemsize
    need = (2 * h * w * img_isz          # image tile
            + 2 * w * new_w * 2          # WxT (bf16)
            + 2 * tr * h * 2             # Wy band (bf16)
            + 2 * tr * new_w * out_isz   # output tile
            + h * new_w * 2)             # persistent rows scratch (bf16)
    vmem_limit = int(min(max(2 * need, 32 * 2**20), 64 * 2**20))

    cost = pl.CostEstimate(
        flops=2 * c * (h * w * new_w + new_h * h * new_w),
        transcendentals=0,
        bytes_accessed=int(c * h * w * img_isz
                           + (new_h * h + w * new_w) * 2
                           + c * new_h * new_w * out_isz),
    )

    return pl.pallas_call(
        _resize_kernel,
        out_shape=jax.ShapeDtypeStruct((c, new_h, new_w), out_dtype),
        grid_spec=pltpu.PrefetchScalarGridSpec(
            num_scalar_prefetch=0,
            grid=grid,
            in_specs=[
                pl.BlockSpec((1, h, w), lambda ci, ri: (ci, 0, 0)),    # image[c]
                pl.BlockSpec((w, new_w), lambda ci, ri: (0, 0)),       # WxT (full)
                pl.BlockSpec((tr, h), lambda ci, ri: (ri, 0)),         # Wy band
            ],
            out_specs=pl.BlockSpec((1, tr, new_w), lambda ci, ri: (ci, ri, 0)),
            scratch_shapes=[pltpu.VMEM((h, new_w), jnp.bfloat16)],
        ),
        compiler_params=pltpu.CompilerParams(
            dimension_semantics=("parallel", "arbitrary"),
            vmem_limit_bytes=vmem_limit),
        cost_estimate=cost,
    )(image, wxt, wy)


# ---------------------------------------------------------------------------
# Module wrapper (forward-pass semantics of RandomShortestSize).
# ---------------------------------------------------------------------------
class RandomShortestSizePallas:
    def __init__(self, min_size, max_size):
        self.min_size = [min_size] if isinstance(min_size, int) else list(min_size)
        self.max_size = max_size

    def __call__(self, image, target=None, key=None):
        if key is None:
            key = jax.random.PRNGKey(0)
        image = jnp.asarray(image)
        if image.ndim not in (2, 3):
            raise ValueError(f"image should be 2/3 dimensional. Got {image.ndim}.")
        squeeze = image.ndim == 2
        if squeeze:
            image = image[None]
        _, orig_h, orig_w = image.shape

        # The random min_size pick fixes the (static) output shape -> one host
        # scalar sync, mirroring the .item() in the PyTorch module.
        idx = int(jax.random.randint(key, (), 0, len(self.min_size)))
        min_size = self.min_size[idx]
        r = min(min_size / min(orig_h, orig_w), self.max_size / max(orig_h, orig_w))
        new_w = int(orig_w * r)
        new_h = int(orig_h * r)

        if jnp.issubdtype(image.dtype, jnp.floating):
            out_dtype = image.dtype
        else:
            out_dtype = jnp.float32  # TODO(synk): uint8 round-back not implemented.

        out_img = _resize_pallas(image, new_h, new_w, out_dtype)
        if squeeze:
            out_img = out_img[0]

        if target is not None:
            target = dict(target)
            if "boxes" in target and target["boxes"].shape[0] > 0:
                boxes = jnp.asarray(target["boxes"], dtype=jnp.float32)
                scale = jnp.array(
                    [new_w / orig_w, new_h / orig_h, new_w / orig_w, new_h / orig_h],
                    dtype=jnp.float32)
                target["boxes"] = boxes * scale
            # TODO(synk): target['masks'] nearest-neighbor resize not implemented.
        return out_img, target


if __name__ == "__main__":
    key = jax.random.PRNGKey(0)
    k_img, k_box, k_run = jax.random.split(key, 3)

    C, H, W = 3, 16, 16
    image = jax.random.normal(k_img, (C, H, W), dtype=jnp.float32)

    n_boxes = 6
    k_xy, k_wh = jax.random.split(k_box)
    xy = jax.random.uniform(k_xy, (n_boxes, 2), minval=0.0, maxval=10.0)
    wh = jax.random.uniform(k_wh, (n_boxes, 2), minval=2.0, maxval=5.0)
    boxes = jnp.concatenate([xy, jnp.minimum(xy + wh, 15.0)], axis=1)
    target = {"boxes": boxes,
              "labels": jnp.arange(1, n_boxes + 1, dtype=jnp.int32)}

    transform = RandomShortestSizePallas(min_size=[8, 12], max_size=24)
    out_image, out_target = transform(image, target, key=k_run)
    jax.block_until_ready((out_image, out_target["boxes"]))

    # Sanity checks (pure-jnp f32 reference; loose tolerance for bf16 MXU inputs).
    new_h, new_w = out_image.shape[1], out_image.shape[2]
    assert out_image.ndim == 3 and out_image.shape[0] == C
    assert new_h <= H and new_w <= W
    wy_f32 = jnp.asarray(_bilinear_matrix(new_h, H))
    wx_f32 = jnp.asarray(_bilinear_matrix(new_w, W))
    ref = jnp.einsum("nh,chw,mw->cnm", wy_f32, image, wx_f32)
    assert bool(jnp.all(jnp.isfinite(out_image)))
    assert float(jnp.max(jnp.abs(out_image - ref))) < 0.1, "resize mismatch vs f32 ref"

    sx, sy = new_w / W, new_h / H
    ref_boxes = boxes * jnp.array([sx, sy, sx, sy], jnp.float32)
    assert out_target["boxes"].shape == (n_boxes, 4)
    assert float(jnp.max(jnp.abs(out_target["boxes"] - ref_boxes))) < 1e-5
    print("KERNEL_OK")
</pallas_src>

<mosaic_0001>
module attributes {stable_mosaic.version = 11 : i64} {
  func.func @_resize_kernel(%arg0: i32, %arg1: i32, %arg2: memref<1x16x16xf32, #tpu.memory_space<vmem>>, %arg3: memref<16x12xbf16, #tpu.memory_space<vmem>>, %arg4: memref<12x16xbf16, #tpu.memory_space<vmem>>, %arg5: memref<1x12x12xf32, #tpu.memory_space<vmem>>, %arg6: memref<16x12xbf16, #tpu.memory_space<vmem>>) attributes {dimension_semantics = [#tpu.dimension_semantics<parallel>, #tpu.dimension_semantics<arbitrary>], iteration_bounds = array<i64: 3, 1>, scalar_prefetch = 0 : i64, scratch_operands = 1 : i64, tpu.core_type = #tpu.core_type<tc>, window_params = [{transform_indices = @transform_0, window_bounds = array<i64: 1, 16, 16>}, {pipeline_mode = #tpu.pipeline_mode<synchronous>, transform_indices = @transform_1, window_bounds = array<i64: 16, 12>}, {transform_indices = @transform_2, window_bounds = array<i64: 12, 16>}, {transform_indices = @transform_3, window_bounds = array<i64: 1, 12, 12>}]} {
    %c0_i32 = arith.constant 0 : i32
    %0 = arith.cmpi eq, %arg1, %c0_i32 : i32
    %1 = arith.extui %0 : i1 to i32
    %c0_i32_0 = arith.constant 0 : i32
    %2 = arith.cmpi ne, %1, %c0_i32_0 : i32
    scf.if %2 {
      %c0_7 = arith.constant 0 : index
      %c0_8 = arith.constant 0 : index
      %c0_9 = arith.constant 0 : index
      %9 = vector.load %arg2[%c0_7, %c0_8, %c0_9] : memref<1x16x16xf32, #tpu.memory_space<vmem>>, vector<1x16x16xf32>
      %10 = vector.shape_cast %9 : vector<1x16x16xf32> to vector<16x16xf32>
      %11 = arith.truncf %10 : vector<16x16xf32> to vector<16x16xbf16>
      %c0_10 = arith.constant 0 : index
      %c0_11 = arith.constant 0 : index
      %12 = vector.load %arg3[%c0_10, %c0_11] : memref<16x12xbf16, #tpu.memory_space<vmem>>, vector<16x12xbf16>
      %cst_12 = arith.constant dense<0.000000e+00> : vector<16x12xf32>
      %13 = tpu.matmul %11, %12, %cst_12 {dimension_numbers = #tpu.dot_dimension_numbers<[1], [0], [0], [1], [0, 0, 1, 1], [], []>} : vector<16x16xbf16>, vector<16x12xbf16>, vector<16x12xf32> -> vector<16x12xf32>
      %14 = arith.truncf %13 : vector<16x12xf32> to vector<16x12xbf16>
      %c0_13 = arith.constant 0 : index
      %c0_14 = arith.constant 0 : index
      %15 = vector.load %arg6[%c0_13, %c0_14] : memref<16x12xbf16, #tpu.memory_space<vmem>>, vector<16x12xbf16>
      tpu.vector_store %arg6[%c0_13, %c0_14], %14 {strides = array<i32>} : memref<16x12xbf16, #tpu.memory_space<vmem>>, vector<16x12xbf16>,
    } else {
    }
    %c0 = arith.constant 0 : index
    %c0_1 = arith.constant 0 : index
    %3 = vector.load %arg4[%c0, %c0_1] : memref<12x16xbf16, #tpu.memory_space<vmem>>, vector<12x16xbf16>
    %c0_2 = arith.constant 0 : index
    %c0_3 = arith.constant 0 : index
    %4 = vector.load %arg6[%c0_2, %c0_3] : memref<16x12xbf16, #tpu.memory_space<vmem>>, vector<16x12xbf16>
    %cst = arith.constant dense<0.000000e+00> : vector<12x12xf32>
    %5 = tpu.matmul %3, %4, %cst {dimension_numbers = #tpu.dot_dimension_numbers<[1], [0], [0], [1], [0, 0, 1, 1], [], []>} : vector<12x16xbf16>, vector<16x12xbf16>, vector<12x12xf32> -> vector<12x12xf32>
    %c0_4 = arith.constant 0 : index
    %c0_5 = arith.constant 0 : index
    %c0_6 = arith.constant 0 : index
    %6 = vector.load %arg5[%c0_4, %c0_5, %c0_6] : memref<1x12x12xf32, #tpu.memory_space<vmem>>, vector<1x12x12xf32>
    %7 = vector.shape_cast %6 : vector<1x12x12xf32> to vector<12x12xf32>
    %8 = vector.shape_cast %5 : vector<12x12xf32> to vector<1x12x12xf32>
    tpu.vector_store %arg5[%c0_4, %c0_5, %c0_6], %8 {strides = array<i32>} : memref<1x12x12xf32, #tpu.memory_space<vmem>>, vector<1x12x12xf32>,
    return
  }
  func.func @transform_0(%arg0: i32, %arg1: i32) -> (i32, i32, i32) {
    %c0_i32 = arith.constant 0 : i32
    %c0_i32_0 = arith.constant 0 : i32
    %c0_i32_1 = arith.constant 0 : i32
    return %arg0, %c0_i32, %c0_i32_0 : i32, i32, i32
  }
  func.func @transform_1(%arg0: i32, %arg1: i32) -> (i32, i32) {
    %c0_i32 = arith.constant 0 : i32
    %c0_i32_0 = arith.constant 0 : i32
    %c0_i32_1 = arith.constant 0 : i32
    return %c0_i32, %c0_i32_0 : i32, i32
  }
  func.func @transform_2(%arg0: i32, %arg1: i32) -> (i32, i32) {
    %c0_i32 = arith.constant 0 : i32
    %c0_i32_0 = arith.constant 0 : i32
    return %arg1, %c0_i32 : i32, i32
  }
  func.func @transform_3(%arg0: i32, %arg1: i32) -> (i32, i32, i32) {
    %c0_i32 = arith.constant 0 : i32
    %c0_i32_0 = arith.constant 0 : i32
    return %arg0, %arg1, %c0_i32 : i32, i32, i32
  }
}

</mosaic_0001>

<llo_original>
// kernel: tpu_custom_call.1
$region0: #{tpu_custom_call.1}
  #allocation0 [shape = 'u32[]', space=smem, size = 0x4, offset = 0x4, fixed_abs, tag = 'smem constant byte address 0x4 - core index']
  #allocation1 [shape = 'u32[144,128]{1,0:T(1,128)}', space=vmem, size = 0x12000, scoped, tag = 'internal scratch']
  #allocation2 [shape = 'bf16[16,12]{1,0:T(16,128)(2,1)}', space=vmem, size = 0x1000, scoped, tag = 'scratch operand']
  %s0 = inlined_call_operand.hbm [shape: f32[3,16,16], index: 0, kind: input, shape index: {}]
  %s1 = inlined_call_operand.hbm [shape: bf16[16,12], index: 1, kind: input, shape index: {}]
  %s2 = inlined_call_operand.hbm [shape: bf16[12,16], index: 2, kind: input, shape index: {}]
  %s3 = inlined_call_operand.hbm [shape: f32[3,12,12], index: 3, kind: output, shape index: {}]
  %s4 = sld [smem:[#allocation0]]
  $region61: #{tpu_custom_call.1} parent=0
    _
  %s6 = ssub.s32 1, %s4
  %s7 = scalar_select 0, %s6, %s4
  $region1: #{tpu_custom_call.1} parent=0
    #allocation3 [shape = 'u8[16384]{0}', space=vmem, size = 0x4000, scoped, tag = 'input window, operand 0']
    #allocation4 [shape = 's32[2]{0}', space=sflag, size = 0x8, scoped, tag = 'scoped memory for tpu_custom_call.1']
    #allocation5 [shape = 's32[2]{0}', space=sflag, size = 0x8, scoped, tag = 'scoped memory for tpu_custom_call.1']
    #allocation6 [shape = 'u8[4096]{0}', space=vmem, size = 0x1000, scoped, tag = 'input window, operand 1, single buffered']
    #allocation7 [shape = 's32[1]{0}', space=sflag, size = 0x4, scoped, tag = 'scoped memory for tpu_custom_call.1']
    #allocation8 [shape = 'u8[4096]{0}', space=vmem, size = 0x1000, scoped, tag = 'input window, operand 2, single buffered']
    #allocation9 [shape = 'u8[16384]{0}', space=vmem, size = 0x4000, scoped, tag = 'output window, operand 0']
    %8 = vsyncpa [#allocation4], 0
    %s9 = scalar_lea.sflag [#allocation4], 1
    %10 = vsyncpa %s9, 0
    %11 = vsyncpa [#allocation7], 0
    %12 = vsyncpa [#allocation5], 0
    %s13 = scalar_lea.sflag [#allocation5], 1
    %14 = vsyncpa %s13, 0
    loop: start=0, step=1, limit=5
    $region2: #{tpu_custom_call.1} parent=1 // loop_pre_header
      _
    $region3: #{tpu_custom_call.1} parent=1 // loop_header
      %s16 = sphi 0, %s20
      %p17 = scmp.ge.s32.totalorder %s16, 5
      %s23 = sphi 0, %s35
      %s24 = sphi 0, %s31
      %s25 = sphi 0, %s23
      %s26 = sphi 0, %s24
      %s27 = sphi 0, %s25
      %s28 = sphi 0, %s26
      %s38 = sphi 0, %s40
      %s41 = sphi 0, %s38
      %s42 = sphi 0, %s41
      %s58 = sphi 0, %s42
      %s62 = sphi 0, %s62
      %s64 = sphi 0, %s62
      %s65 = sphi 0, %s64
      %s79 = sphi 0, %s65
      %s85 = sphi 0, %s87
      %s88 = sphi 0, %s85
      %s89 = sphi 0, %s88
      %s105 = sphi 0, %s89
      %s113 = sphi 0, %s115
      %s116 = sphi 0, %s113
      %s117 = sphi 0, %s116
      %s133 = sphi 0, %s117
    $region4: #{tpu_custom_call.1} parent=1 // loop_header_branch
      %19 = sbr.rel (%p17) target = $region8
    $region5: #{tpu_custom_call.1} parent=1 // loop_body
      %s21 = ssub.s32 %s16, 1
      %s22 = ssub.s32 %s16, 2
      %s29 = sadd.s32 1, %s24
      %p30 = scmp.ge.s32.totalorder %s29, 1
      %s31 = scalar_select %p30, 0, %s29
      %s32 = sadd.s32 1, %s23
      %s33 = scalar_select %p30, %s32, %s23
      %p34 = scmp.ge.s32.totalorder %s33, 3
      %s35 = scalar_select %p34, 0, %s33
      %s36 = ssub.s32 %s23, %s35
      %p37 = scmp.eq.s32.totalorder %s36, 0
      %s39 = sadd.s32 %s38, 1
      %s40 = scalar_select %p37, %s38, %s39
      %p43 = pneg %p37
      %p44 = scmp.eq.s32.totalorder %s16, 2
      %p45 = por %p43, %p44
      %p46 = scmp.ne.s32.totalorder %s38, %s41
      %p47 = scmp.eq.s32.totalorder %s16, 0
      %p48 = por %p46, %p47
      %p49 = scmp.ne.s32.totalorder %s38, %s41
      %p50 = scmp.eq.s32.totalorder %s21, 2
      %p51 = por %p49, %p50
      %p52 = scmp.ne.s32.totalorder %s41, %s42
      %p53 = scmp.eq.s32.totalorder %s21, 0
      %p54 = por %p52, %p53
      %p55 = scmp.ne.s32.totalorder %s41, %s42
      %p56 = scmp.eq.s32.totalorder %s22, 2
      %p57 = por %p55, %p56
      %p59 = scmp.ne.s32.totalorder %s42, %s58
      %p60 = scmp.eq.s32.totalorder %s22, 0
      %p61 = por %p59, %p60
      %s63 = sadd.s32 %s62, 1
      %p66 = scmp.eq.s32.totalorder %s16, 2
      %p67 = scmp.ne.s32.totalorder %s62, %s64
      %p68 = scmp.eq.s32.totalorder %s16, 0
      %p69 = por %p67, %p68
      %p70 = scmp.ne.s32.totalorder %s62, %s64
      %p71 = scmp.eq.s32.totalorder %s21, 2
      %p72 = por %p70, %p71
      %p73 = scmp.ne.s32.totalorder %s64, %s65
      %p74 = scmp.eq.s32.totalorder %s21, 0
      %p75 = por %p73, %p74
      %p76 = scmp.ne.s32.totalorder %s64, %s65
      %p77 = scmp.eq.s32.totalorder %s22, 2
      %p78 = por %p76, %p77
      %p80 = scmp.ne.s32.totalorder %s65, %s79
      %p81 = scmp.eq.s32.totalorder %s22, 0
      %p82 = por %p80, %p81
      %s83 = ssub.s32 %s24, %s31
      %p84 = scmp.eq.s32.totalorder %s83, 0
      %s86 = sadd.s32 %s85, 1
      %s87 = scalar_select %p84, %s85, %s86
      %p90 = pneg %p84
      %p91 = scmp.eq.s32.totalorder %s16, 2
      %p92 = por %p90, %p91
      %p93 = scmp.ne.s32.totalorder %s85, %s88
      %p94 = scmp.eq.s32.totalorder %s16, 0
      %p95 = por %p93, %p94
      %p96 = scmp.ne.s32.totalorder %s85, %s88
      %p97 = scmp.eq.s32.totalorder %s21, 2
      %p98 = por %p96, %p97
      %p99 = scmp.ne.s32.totalorder %s88, %s89
      %p100 = scmp.eq.s32.totalorder %s21, 0
      %p101 = por %p99, %p100
      %p102 = scmp.ne.s32.totalorder %s88, %s89
      %p103 = scmp.eq.s32.totalorder %s22, 2
      %p104 = por %p102, %p103
      %p106 = scmp.ne.s32.totalorder %s89, %s105
      %p107 = scmp.eq.s32.totalorder %s22, 0
      %p108 = por %p106, %p107
      %s109 = ssub.s32 %s23, %s35
      %s110 = ssub.s32 %s24, %s31
      %s111 = sor.u32 %s109, %s110
      %p112 = scmp.eq.s32.totalorder %s111, 0
      %s114 = sadd.s32 %s113, 1
      %s115 = scalar_select %p112, %s113, %s114
      %p118 = pneg %p112
      %p119 = scmp.eq.s32.totalorder %s16, 2
      %p120 = por %p118, %p119
      %p121 = scmp.ne.s32.totalorder %s113, %s116
      %p122 = scmp.eq.s32.totalorder %s16, 0
      %p123 = por %p121, %p122
      %p124 = scmp.ne.s32.totalorder %s113, %s116
      %p125 = scmp.eq.s32.totalorder %s21, 2
      %p126 = por %p124, %p125
      %p127 = scmp.ne.s32.totalorder %s116, %s117
      %p128 = scmp.eq.s32.totalorder %s21, 0
      %p129 = por %p127, %p128
      %p130 = scmp.ne.s32.totalorder %s116, %s117
      %p131 = scmp.eq.s32.totalorder %s22, 2
      %p132 = por %p130, %p131
      %p134 = scmp.ne.s32.totalorder %s117, %s133
      %p135 = scmp.eq.s32.totalorder %s22, 0
      %p136 = por %p134, %p135
      %p137 = scmp.le.s32.totalorder 1, %s16
      %p138 = scmp.lt.s32.totalorder %s16, 4
      %p139 = pnand %p137, %p138
      %p140 = pneg %p139
      // Predicated region
      $region9: #{tpu_custom_call.1} parent=5 // pred_check
        _
      $region10: #{tpu_custom_call.1} parent=5 // pred_check_branch
        %142 = sbr.rel (%p139) target = $region12
      $region11: #{tpu_custom_call.1} parent=5 // pred_region
        %s143 = ssub.s32 %s16, 1
        // Predicated region
        $region13: #{tpu_custom_call.1} parent=11 // pred_check
          %p144 = pneg %p75
        $region14: #{tpu_custom_call.1} parent=11 // pred_check_branch
          %146 = sbr.rel (%p144) target = $region16
        $region15: #{tpu_custom_call.1} parent=11 // pred_region
          %s148 = ssub.s32 128, 128
          %149 = vsyncadd [#allocation7], %s148
          %s150 = sshll.u32 [#allocation6], 4
          %s151 = int_to_ptr.vmem [resolvable:$true] %s150
          %156 = dma.hbm_to_vmem [thread:$0]  %s1, 128, %s151, [#allocation7], 64, 64, 4
        $region16: #{tpu_custom_call.1} parent=11 // pred_fallthru
          _
        // Predicated region
        $region17: #{tpu_custom_call.1} parent=11 // pred_check
          %p157 = pneg %p101
        $region18: #{tpu_custom_call.1} parent=11 // pred_check_branch
          %159 = sbr.rel (%p157) target = $region20
        $region19: #{tpu_custom_call.1} parent=11 // pred_region
          %s160 = smul.u32 2, %s26
          %s162 = ssub.s32 128, 128
          %163 = vsyncadd [#allocation7], %s162
          %s164 = smul.addr %s160, 64
          %s165 = scalar_lea.hbm %s2, %s164
          %s166 = sshll.u32 [#allocation8], 4
          %s167 = int_to_ptr.vmem [resolvable:$true] %s166
          %172 = dma.hbm_to_vmem [thread:$0]  %s165, 128, %s167, [#allocation7], 64, 64, 4
        $region20: #{tpu_custom_call.1} parent=11 // pred_fallthru
          _
      $region12: #{tpu_custom_call.1} parent=5 // pred_fallthru
        _
      %p173 = scmp.lt.s32.totalorder %s16, 3
      // Predicated region
      $region21: #{tpu_custom_call.1} parent=5 // pred_check
        %p174 = pneg %p173
      $region22: #{tpu_custom_call.1} parent=5 // pred_check_branch
        %176 = sbr.rel (%p174) target = $region24
      $region23: #{tpu_custom_call.1} parent=5 // pred_region
        // Predicated region
        $region25: #{tpu_custom_call.1} parent=23 // pred_check
          %p177 = pneg %p48
        $region26: #{tpu_custom_call.1} parent=23 // pred_check_branch
          %179 = sbr.rel (%p177) target = $region28
        $region27: #{tpu_custom_call.1} parent=23 // pred_region
          %s180 = sand.u32 %s38, 1
          %s181 = scalar_lea.sflag [#allocation4], %s180
          %s182 = sand.u32 %s38, 1
          %s183 = smul.addr %s182, 16
          %s184 = scalar_lea.vmem [#allocation3], %s183
          %s186 = ssub.s32 256, 256
          %187 = vsyncadd %s181, %s186
          %s188 = smul.addr %s23, 2
          %s189 = smul.addr %s188, 128
          %s190 = scalar_lea.hbm %s0, %s189
          %s191 = sshll.u32 %s184, 4
          %s192 = int_to_ptr.vmem [resolvable:$true] %s191
          %197 = dma.hbm_to_vmem [thread:$0]  %s190, 256, %s192, %s181, 128, 128, 8
        $region28: #{tpu_custom_call.1} parent=23 // pred_fallthru
          _
      $region24: #{tpu_custom_call.1} parent=5 // pred_fallthru
        _
      %p198 = scmp.le.s32.totalorder 1, %s16
      %p199 = scmp.lt.s32.totalorder %s16, 4
      %p200 = pnand %p198, %p199
      %p201 = pneg %p200
      // Predicated region
      $region29: #{tpu_custom_call.1} parent=5 // pred_check
        _
      $region30: #{tpu_custom_call.1} parent=5 // pred_check_branch
        %203 = sbr.rel (%p200) target = $region32
      $region31: #{tpu_custom_call.1} parent=5 // pred_region
        %s204 = ssub.s32 %s16, 1
        %s205 = sand.u32 %s41, 1
        %s206 = scalar_lea.sflag [#allocation4], %s205
        %s207 = sand.u32 %s41, 1
        %s208 = smul.addr %s207, 16
        %s209 = scalar_lea.vmem [#allocation3], %s208
        // Predicated region
        $region33: #{tpu_custom_call.1} parent=31 // pred_check
          %p210 = pneg %p54
        $region34: #{tpu_custom_call.1} parent=31 // pred_check_branch
          %212 = sbr.rel (%p210) target = $region36
        $region35: #{tpu_custom_call.1} parent=31 // pred_region
          %213 = dma.done %s206, 256
        $region36: #{tpu_custom_call.1} parent=31 // pred_fallthru
          _
        // Predicated region
        $region37: #{tpu_custom_call.1} parent=31 // pred_check
          %p214 = pneg %p75
        $region38: #{tpu_custom_call.1} parent=31 // pred_check_branch
          %216 = sbr.rel (%p214) target = $region40
        $region39: #{tpu_custom_call.1} parent=31 // pred_region
          %217 = dma.done [#allocation7], 128
        $region40: #{tpu_custom_call.1} parent=31 // pred_fallthru
          _
        // Predicated region
        $region41: #{tpu_custom_call.1} parent=31 // pred_check
          %p218 = pneg %p101
        $region42: #{tpu_custom_call.1} parent=31 // pred_check_branch
          %220 = sbr.rel (%p218) target = $region44
        $region43: #{tpu_custom_call.1} parent=31 // pred_region
          %221 = dma.done [#allocation7], 128
        $region44: #{tpu_custom_call.1} parent=31 // pred_fallthru
          _
        %s222 = sand.u32 %s41, 1
        %s223 = scalar_lea.sflag [#allocation4], %s222
        %s224 = sand.u32 %s41, 1
        %s225 = smul.addr %s224, 16
        %s226 = scalar_lea.vmem [#allocation3], %s225
        %p227 = pneg %p54
        %p228 = pneg %p51
        %p229 = pneg %p75
        %p230 = pneg %p72
        %p231 = pneg %p101
        %p232 = pneg %p98
        %p233 = pneg %p129
        %p234 = pneg %p126
        %s235 = sand.u32 %s116, 1
        %s236 = scalar_lea.sflag [#allocation5], %s235
        %s237 = sand.u32 %s116, 1
        %s238 = smul.addr %s237, 16
        %s239 = scalar_lea.vmem [#allocation9], %s238
        %s240 = smul.u32 2, %s26
        %s241 = smul.u32 2, %s26
        %p243 = scmp.eq.s32.totalorder %s26, 0
        // Predicated region
        $region45: #{tpu_custom_call.1} parent=31 // pred_check
          %p244 = pneg %p243
        $region46: #{tpu_custom_call.1} parent=31 // pred_check_branch
          %246 = sbr.rel (%p244) target = $region48
        $region47: #{tpu_custom_call.1} parent=31 // pred_region
          %v247 = vld [vmem:[%s209] sm:$0xff]
          %v248 = vld [vmem:[%s209 + $0x8] sm:$0xff]
          %v249 = vpack.c.bf16 %v248, %v247
          %v250 = vld [vmem:[#allocation6] sm:$0xf]
          %v251 = vld [vmem:[#allocation6 + $0x4] sm:$0xf]
          %v254 = vunpack.c.l.b16 %v250
          %v255 = vunpack.c.l.b16 %v251
          %v256 = vpack.c.b16 %v255, %v254
          %vm258 = vcmask 130048
          %v260 = vsel %vm258, %v249, 0
          %262 = vmatprep.subr.bf16.mxu0 0
          %263 = vmatpush1.bf16.msra.mxu0 %v256
          %264 = vmatprep.subr.bf16.mxu0 0
          %265 = vmatpush1.bf16.msra.mxu0 0
          %266 = vmatprep.subr.bf16.mxu0 0
          %267 = vmatpush1.bf16.msra.mxu0 0
          %268 = vmatprep.subr.bf16.mxu0 0
          %269 = vmatpush1.bf16.msra.mxu0 0
          %270 = vmatprep.subr.bf16.mxu0 0
          %271 = vmatpush1.bf16.msra.mxu0 0
          %272 = vmatprep.subr.bf16.mxu0 0
          %273 = vmatpush1.bf16.msra.mxu0 0
          %274 = vmatprep.subr.bf16.mxu0 0
          %275 = vmatpush1.bf16.msra.mxu0 0
          %276 = vmatprep.subr.bf16.mxu0 0
          %277 = vmatpush1.bf16.msra.mxu0 0
          %278 = vmatprep.subr.bf16.mxu0 0
          %279 = vmatpush1.bf16.msra.mxu0 0
          %280 = vmatprep.subr.bf16.mxu0 0
          %281 = vmatpush1.bf16.msra.mxu0 0
          %282 = vmatprep.subr.bf16.mxu0 0
          %283 = vmatpush1.bf16.msra.mxu0 0
          %284 = vmatprep.subr.bf16.mxu0 0
          %285 = vmatpush1.bf16.msra.mxu0 0
          %286 = vmatprep.subr.bf16.mxu0 0
          %287 = vmatpush1.bf16.msra.mxu0 0
          %288 = vmatprep.subr.bf16.mxu0 0
          %289 = vmatpush1.bf16.msra.mxu0 0
          %290 = vmatprep.subr.bf16.mxu0 0
          %291 = vmatpush1.bf16.msra.mxu0 0
          %292 = vmatprep.subr.bf16.mxu0 0
          %293 = vmatpush1.bf16.msra.mxu0 0
          %294 = vmatprep.mubr.bf16.mxu0 0
          %295 = vmatmul.mubr.bf16.gmra.mrb[0].mxu0 %v260
          %v296 = vpop.f32.mrb[0].mxu0
          %v297 = vadd.f32 0.0, %v296
          %v298 = vpop.f32.mrb[0].mxu0
          %v299 = vpop.f32.mrb[0].mxu0
          %v300 = vadd.f32 0.0, %v299
          %v301 = vpop.f32.mrb[0].mxu0
          %302 = vdwg.mxu0
          %v303 = vpack.c.bf16 %v300, %v297
          %vm304 = vcmask 97280
          %305 = vst.msk [vmem:[#allocation2] sm:$0xff] %vm304, %v303
        $region48: #{tpu_custom_call.1} parent=31 // pred_fallthru
          _
        %v306 = vld [vmem:[#allocation8] sm:$0xf]
        %v307 = vld [vmem:[#allocation8 + $0x4] sm:$0x3]
        %v308 = vld [vmem:[#allocation2] sm:$0xff]
        %v311 = vunpack.c.l.b16 %v306
        %v312 = vunpack.c.l.b16 %v307
        %v313 = vpack.c.b16 %v312, %v311
        %vm314 = vcmask 130048
        %v316 = vsel %vm314, %v313, 0
        %318 = vmatprep.subr.bf16.mxu0 0
        %319 = vmatpush1.bf16.msra.mxu0 %v308
        %320 = vmatprep.subr.bf16.mxu0 0
        %321 = vmatpush1.bf16.msra.mxu0 0
        %322 = vmatprep.subr.bf16.mxu0 0
        %323 = vmatpush1.bf16.msra.mxu0 0
        %324 = vmatprep.subr.bf16.mxu0 0
        %325 = vmatpush1.bf16.msra.mxu0 0
        %326 = vmatprep.subr.bf16.mxu0 0
        %327 = vmatpush1.bf16.msra.mxu0 0
        %328 = vmatprep.subr.bf16.mxu0 0
        %329 = vmatpush1.bf16.msra.mxu0 0
        %330 = vmatprep.subr.bf16.mxu0 0
        %331 = vmatpush1.bf16.msra.mxu0 0
        %332 = vmatprep.subr.bf16.mxu0 0
        %333 = vmatpush1.bf16.msra.mxu0 0
        %334 = vmatprep.subr.bf16.mxu0 0
        %335 = vmatpush1.bf16.msra.mxu0 0
        %336 = vmatprep.subr.bf16.mxu0 0
        %337 = vmatpush1.bf16.msra.mxu0 0
        %338 = vmatprep.subr.bf16.mxu0 0
        %339 = vmatpush1.bf16.msra.mxu0 0
        %340 = vmatprep.subr.bf16.mxu0 0
        %341 = vmatpush1.bf16.msra.mxu0 0
        %342 = vmatprep.subr.bf16.mxu0 0
        %343 = vmatpush1.bf16.msra.mxu0 0
        %344 = vmatprep.subr.bf16.mxu0 0
        %345 = vmatpush1.bf16.msra.mxu0 0
        %346 = vmatprep.subr.bf16.mxu0 0
        %347 = vmatpush1.bf16.msra.mxu0 0
        %348 = vmatprep.subr.bf16.mxu0 0
        %349 = vmatpush1.bf16.msra.mxu0 0
        %350 = vmatprep.mubr.bf16.mxu0 0
        %351 = vmatmul.mubr.bf16.gmra.mrb[0].mxu0 %v316
        %v352 = vpop.f32.mrb[0].mxu0
        %v353 = vadd.f32 0.0, %v352
        %v354 = vpop.f32.mrb[0].mxu0
        %v355 = vpop.f32.mrb[0].mxu0
        %v356 = vadd.f32 0.0, %v355
        %v357 = vpop.f32.mrb[0].mxu0
        %358 = vdwg.mxu0
        %vm359 = vcmask 97280
        %360 = vst.msk [vmem:[%s239] sm:$0xff] %vm359, %v353
        %vm361 = vcmask 93184
        %362 = vst.msk [vmem:[%s239 + $0x8] sm:$0xf] %vm361, %v356
        %s363 = sand.u32 %s116, 1
        %s364 = scalar_lea.sflag [#allocation5], %s363
        %s365 = sand.u32 %s116, 1
        %s366 = smul.addr %s365, 16
        %s367 = scalar_lea.vmem [#allocation9], %s366
        // Predicated region
        $region49: #{tpu_custom_call.1} parent=31 // pred_check
          %p368 = pneg %p126
        $region50: #{tpu_custom_call.1} parent=31 // pred_check_branch
          %370 = sbr.rel (%p368) target = $region52
        $region51: #{tpu_custom_call.1} parent=31 // pred_region
          %s371 = smul.u32 2, %s26
          %s373 = ssub.s32 256, 256
          %374 = vsyncadd %s364, %s373
          %s375 = smul.addr %s25, 2
          %s376 = sadd.s32 %s371, %s375
          %s377 = smul.addr %s376, 128
          %s378 = scalar_lea.hbm %s3, %s377
          %s379 = sshll.u32 %s367, 4
          %s380 = int_to_ptr.vmem [resolvable:$true] %s379
          %385 = dma.vmem_to_hbm [thread:$0]  %s380, 256, %s378, %s364, 128, 128, 8
        $region52: #{tpu_custom_call.1} parent=31 // pred_fallthru
          _
      $region32: #{tpu_custom_call.1} parent=5 // pred_fallthru
        _
      %p386 = scmp.le.s32.totalorder 2, %s16
      // Predicated region
      $region53: #{tpu_custom_call.1} parent=5 // pred_check
        %p387 = pneg %p386
      $region54: #{tpu_custom_call.1} parent=5 // pred_check_branch
        %389 = sbr.rel (%p387) target = $region56
      $region55: #{tpu_custom_call.1} parent=5 // pred_region
        %s390 = ssub.s32 %s16, 2
        // Predicated region
        $region57: #{tpu_custom_call.1} parent=55 // pred_check
          %p391 = pneg %p132
        $region58: #{tpu_custom_call.1} parent=55 // pred_check_branch
          %393 = sbr.rel (%p391) target = $region60
        $region59: #{tpu_custom_call.1} parent=55 // pred_region
          %s394 = sand.u32 %s117, 1
          %s395 = scalar_lea.sflag [#allocation5], %s394
          %s396 = sand.u32 %s117, 1
          %s397 = smul.addr %s396, 16
          %s398 = scalar_lea.vmem [#allocation9], %s397
          %399 = dma.done %s395, 256
        $region60: #{tpu_custom_call.1} parent=55 // pred_fallthru
          _
      $region56: #{tpu_custom_call.1} parent=5 // pred_fallthru
        _
    $region6: #{tpu_custom_call.1} parent=1 // loop_footer
      %s20 = sadd.s32 1, %s16
    $region7: #{tpu_custom_call.1} parent=1 // loop_footer_branch
      %15 = sbr.rel target = $region3
    $region8: #{tpu_custom_call.1} parent=1 // loop_exit
      _
    %400 = vsyncpa [#allocation4], 1
    %s401 = scalar_lea.sflag [#allocation4], 1
    %402 = vsyncpa %s401, 1
    %403 = vsyncpa [#allocation7], 1
    %404 = vsyncpa [#allocation5], 1
    %s405 = scalar_lea.sflag [#allocation5], 1
    %406 = vsyncpa %s405, 1

</llo_original>
